<compile_context>
chip_gen: v7x
topology: tpu7x:2x2x1
jax: 0.10.0
libtpu: 0.0.40
codegen_flags: <defaults>
</compile_context>

<pallas_src>
import jax
import jax.numpy as jnp
from jax.experimental import pallas as pl
from jax.experimental.pallas import tpu as pltpu


_TARGET_BLOCK_ELEMS = 1 << 20          # 1 Mi elems = 4 MiB per f32 buffer/step
_VMEM_LIMIT_BYTES = 40 * 1024 * 1024   # fits 16 MiB of dbl-buffered tiles on all gens


def _relu_kernel(x_ref, o_ref):
    x = x_ref[...]
    # Exact PyTorch forward: (x > 0).float() * x  (float32 output).
    o_ref[...] = (x > 0).astype(jnp.float32) * x.astype(jnp.float32)


def _pick_cols(n):
    """Largest multiple-of-128 divisor of n (lane-dense, pad-free); None if ragged."""
    for c in (1024, 512, 256, 128):
        if n % c == 0:
            return c
    return None


def _pick_row_tile(rows, cols):
    """Row tile: big enough to amortize the ~0.35us grid-step overhead, >=2
    balanced steps when possible (v7x 2-TC megacore), multiple of 16
    (bf16-safe sublane tiling)."""
    max_rows = max(_TARGET_BLOCK_ELEMS // cols, 16)
    if rows <= 16:
        return rows                      # full-extent block (always legal)
    if rows <= 2 * max_rows:
        half = ((pl.cdiv(rows, 2) + 15) // 16) * 16
        return min(half, rows)
    return max_rows


def _relu_2d(x2d, rows, cols):
    row_tile = _pick_row_tile(rows, cols)
    grid = (pl.cdiv(rows, row_tile),)    # ragged last block is masked by Pallas
    return pl.pallas_call(
        _relu_kernel,
        out_shape=jax.ShapeDtypeStruct((rows, cols), jnp.float32),
        grid_spec=pltpu.PrefetchScalarGridSpec(
            num_scalar_prefetch=0,
            grid=grid,
            in_specs=[pl.BlockSpec((row_tile, cols), lambda i: (i, 0))],
            out_specs=pl.BlockSpec((row_tile, cols), lambda i: (i, 0)),
        ),
        compiler_params=pltpu.CompilerParams(
            dimension_semantics=("parallel",),
            vmem_limit_bytes=_VMEM_LIMIT_BYTES,
        ),
    )(x2d)


def relu_pallas(x):
    """Elementwise ReLU matching torch `(input > 0).float() * input` (f32 out)."""
    orig_shape = x.shape
    flat = x.reshape(-1)                 # any rank, including 0-d
    n = flat.size
    if n == 0:
        return jnp.zeros(orig_shape, dtype=jnp.float32)

    cols = _pick_cols(n)
    if cols is not None:
        # Common path: n is 128-aligned -> pure reshape (layout no-op), no pad
        # and no output slice, so the only HBM traffic is the kernel's own
        # read + write (near the HBM roofline).
        rows = n // cols
        out = _relu_2d(flat.reshape(rows, cols), rows, cols)
        return out.reshape(orig_shape)

    # Rare ragged path (element count not a multiple of 128): pad to a full
    # lane-dense slab and slice the result back.  ReLU(0) == 0 so zero padding
    # is harmless and gets sliced off.
    # TODO(synk): for very large non-128-aligned tensors, stream the bulk via
    # the pad-free path above and handle only the final partial chunk with a
    # tiny separate op instead of padding/slicing the whole array.
    cols = 1024
    rows = pl.cdiv(n, cols)
    padded = rows * cols
    flat = jnp.pad(flat, (0, padded - n))
    out = _relu_2d(flat.reshape(rows, cols), rows, cols)
    return out.reshape(-1)[:n].reshape(orig_shape)


if __name__ == "__main__":
    key = jax.random.PRNGKey(0)
    # Small NCHW-shaped input consistent with a conv-style module.
    x = jax.random.normal(key, (2, 4, 16, 16), dtype=jnp.float32)

    y = relu_pallas(x)
    jax.block_until_ready(y)

    # Reference check (PyTorch-equivalent math).
    y_ref = (x > 0).astype(jnp.float32) * x
    assert y.shape == x.shape and y.dtype == jnp.float32
    assert jnp.allclose(y, y_ref), "mismatch vs reference ReLU"

    # Secondary check: 128-aligned (but not 1024-aligned) size -> pad-free path.
    x2 = jax.random.normal(jax.random.PRNGKey(1), (2, 3, 8, 16), dtype=jnp.float32)
    y2 = relu_pallas(x2)
    jax.block_until_ready(y2)
    assert jnp.allclose(y2, (x2 > 0).astype(jnp.float32) * x2)

    print("KERNEL_OK")
</pallas_src>

<mosaic_0001>
module attributes {stable_mosaic.version = 11 : i64} {
  func.func @_relu_kernel(%arg0: i32, %arg1: memref<2x1024xf32, #tpu.memory_space<vmem>>, %arg2: memref<2x1024xf32, #tpu.memory_space<vmem>>) attributes {dimension_semantics = [#tpu.dimension_semantics<parallel>], iteration_bounds = array<i64: 1>, scalar_prefetch = 0 : i64, scratch_operands = 0 : i64, tpu.core_type = #tpu.core_type<tc>, window_params = [{transform_indices = @transform_0, window_bounds = array<i64: 2, 1024>}, {transform_indices = @transform_1, window_bounds = array<i64: 2, 1024>}]} {
    %c0 = arith.constant 0 : index
    %c0_0 = arith.constant 0 : index
    %0 = vector.load %arg1[%c0, %c0_0] : memref<2x1024xf32, #tpu.memory_space<vmem>>, vector<2x1024xf32>
    %cst = arith.constant 0.000000e+00 : f32
    %1 = vector.broadcast %cst : f32 to vector<2x1024xf32>
    %2 = arith.cmpf ogt, %0, %1 : vector<2x1024xf32>
    %3 = arith.extui %2 : vector<2x1024xi1> to vector<2x1024xi32>
    %4 = arith.sitofp %3 : vector<2x1024xi32> to vector<2x1024xf32>
    %5 = arith.mulf %4, %0 : vector<2x1024xf32>
    %c0_1 = arith.constant 0 : index
    %c0_2 = arith.constant 0 : index
    %6 = vector.load %arg2[%c0_1, %c0_2] : memref<2x1024xf32, #tpu.memory_space<vmem>>, vector<2x1024xf32>
    tpu.vector_store %arg2[%c0_1, %c0_2], %5 {strides = array<i32>} : memref<2x1024xf32, #tpu.memory_space<vmem>>, vector<2x1024xf32>,
    return
  }
  func.func @transform_0(%arg0: i32) -> (i32, i32) {
    %c0_i32 = arith.constant 0 : i32
    %c0_i32_0 = arith.constant 0 : i32
    return %arg0, %c0_i32 : i32, i32
  }
  func.func @transform_1(%arg0: i32) -> (i32, i32) {
    %c0_i32 = arith.constant 0 : i32
    %c0_i32_0 = arith.constant 0 : i32
    return %arg0, %c0_i32 : i32, i32
  }
}

</mosaic_0001>

<llo_original>
// kernel: tpu_custom_call.1
$region0: #{tpu_custom_call.1}
  #allocation0 [shape = 'u32[]', space=smem, size = 0x4, offset = 0x4, fixed_abs, tag = 'smem constant byte address 0x4 - core index']
  #allocation1 [shape = 'u32[144,128]{1,0:T(1,128)}', space=vmem, size = 0x12000, scoped, tag = 'internal scratch']
  %s0 = inlined_call_operand.hbm [shape: f32[2,1024], index: 0, kind: input, shape index: {}]
  %s1 = inlined_call_operand.hbm [shape: f32[2,1024], index: 1, kind: output, shape index: {}]
  %s2 = sld [smem:[#allocation0]]
  $region18: #{tpu_custom_call.1} parent=0
    _
  %s4 = ssub.s32 1, %s2
  %s5 = scalar_select 0, %s4, %s2
  $region1: #{tpu_custom_call.1} parent=0
    #allocation2 [shape = 'u8[8192]{0}', space=vmem, size = 0x2000, scoped, tag = 'input window, operand 0, single buffered']
    #allocation3 [shape = 's32[1]{0}', space=sflag, size = 0x4, scoped, tag = 'scoped memory for tpu_custom_call.1']
    #allocation4 [shape = 's32[1]{0}', space=sflag, size = 0x4, scoped, tag = 'scoped memory for tpu_custom_call.1']
    #allocation5 [shape = 'u8[8192]{0}', space=vmem, size = 0x2000, scoped, tag = 'output window, operand 0, single buffered']
    %6 = vsyncpa [#allocation3], 0
    %7 = vsyncpa [#allocation4], 0
    // Predicated region
    $region2: #{tpu_custom_call.1} parent=1 // pred_check
      _
    $region3: #{tpu_custom_call.1} parent=1 // pred_check_branch
      %9 = sbr.rel (0) target = $region5
    $region4: #{tpu_custom_call.1} parent=1 // pred_region
      %s11 = ssub.s32 256, 256
      %12 = vsyncadd [#allocation3], %s11
      %s14 = sshll.u32 [#allocation2], 4
      %s15 = int_to_ptr.vmem [resolvable:$true] %s14
      %17 = dma.hbm_to_vmem [thread:$0]  %s0, 256, %s15, [#allocation3]
    $region5: #{tpu_custom_call.1} parent=1 // pred_fallthru
      _
    // Predicated region
    $region6: #{tpu_custom_call.1} parent=1 // pred_check
      _
    $region7: #{tpu_custom_call.1} parent=1 // pred_check_branch
      %19 = sbr.rel (0) target = $region9
    $region8: #{tpu_custom_call.1} parent=1 // pred_region
      %20 = dma.done [#allocation3], 256
    $region9: #{tpu_custom_call.1} parent=1 // pred_fallthru
      _
    %v21 = vld [vmem:[#allocation2] sm:$0xff]
    %v22 = vld [vmem:[#allocation2 + $0x8] sm:$0xff]
    %vm23 = vcmp.gt.f32.partialorder %v21, 0.0
    %vm24 = vcmp.gt.f32.partialorder %v22, 0.0
    %v25 = vsel %vm23, 1, 0
    %v26 = vsel %vm24, 1, 0
    %v27 = vcvt.s32.f32 %v25
    %v28 = vcvt.s32.f32 %v26
    %v29 = vmul.f32 %v27, %v21
    %v30 = vmul.f32 %v28, %v22
    %31 = vst [vmem:[#allocation5] sm:$0xff] %v29
    %32 = vst [vmem:[#allocation5 + $0x8] sm:$0xff] %v30
    // Predicated region
    $region10: #{tpu_custom_call.1} parent=1 // pred_check
      _
    $region11: #{tpu_custom_call.1} parent=1 // pred_check_branch
      %34 = sbr.rel (0) target = $region13
    $region12: #{tpu_custom_call.1} parent=1 // pred_region
      %s36 = ssub.s32 256, 256
      %37 = vsyncadd [#allocation4], %s36
      %s39 = sshll.u32 [#allocation5], 4
      %s40 = int_to_ptr.vmem [resolvable:$true] %s39
      %42 = dma.vmem_to_hbm [thread:$0]  %s40, 256, %s1, [#allocation4]
    $region13: #{tpu_custom_call.1} parent=1 // pred_fallthru
      _
    // Predicated region
    $region14: #{tpu_custom_call.1} parent=1 // pred_check
      _
    $region15: #{tpu_custom_call.1} parent=1 // pred_check_branch
      %44 = sbr.rel (0) target = $region17
    $region16: #{tpu_custom_call.1} parent=1 // pred_region
      %45 = dma.done [#allocation4], 256
    $region17: #{tpu_custom_call.1} parent=1 // pred_fallthru
      _
    %46 = vsyncpa [#allocation3], 1
    %47 = vsyncpa [#allocation4], 1

</llo_original>
